<compile_context>
chip_gen: v6e
topology: v6e:2x2x1
jax: 0.10.0
libtpu: 0.0.40
codegen_flags: <defaults>
</compile_context>

<pallas_src>
import functools
import math

import jax
import jax.numpy as jnp
from jax import lax
from jax.experimental import pallas as pl
from jax.experimental.pallas import tpu as pltpu


_INV_SQRT2 = 1.0 / math.sqrt(2.0)


def _gelu_exact(x):
    # PyTorch nn.GELU() default: exact erf-based GELU.
    return 0.5 * x * (1.0 + lax.erf(x * jnp.float32(_INV_SQRT2)))


def sfi_kernel(pk_ref, ft_ref, wc_ref, wp_ref, bp_ref, out_ref, cross_ref,
               *, n_batch, t_len):
    # pk_ref : (C+2, N*T)  rows 0..C-1 = xs (channel-major), row C = ones,
    #                      row C+1 = mask
    # ft_ref : (F,   N*T)  feature_t, batch elements concatenated along T
    # wc_ref : (F, C+1)    augmented conv weight [wc | bc]
    # wp_ref : (2F, F)     packed FF weights [w1 ; w2] (PyTorch (out, in) layout)
    # bp_ref : (F, 2)      packed FF biases  [b1 , b2]
    F = wc_ref.shape[0]
    C1 = wc_ref.shape[1]                      # C + 1 (ones row included)

    xs_aug = pk_ref[0:C1, :]                  # (C+1, N*T)
    msk = pk_ref[C1:C1 + 1, :]                # (1,   N*T)
    ft = ft_ref[...]                          # (F,   N*T)
    wc_aug = wc_ref[...]                      # (F, C+1)
    w1 = wp_ref[0:F, :]                       # (F, F)
    w2 = wp_ref[F:2 * F, :]                   # (F, F)
    b1 = bp_ref[:, 0:1]                       # (F, 1)
    b2 = bp_ref[:, 1:2]                       # (F, 1)

    # 1x1 Conv1d + bias for ALL batch elements in one MXU push:
    # (F, C+1) @ (C+1, N*T) -> (F, N*T).  Result directly in (F, T*) layout.
    fs = jnp.dot(wc_aug, xs_aug, preferred_element_type=jnp.float32)

    inv_t = jnp.float32(1.0 / t_len)

    # Attention is the only per-batch-element piece (scores mix rows within a
    # batch element only).  Static column slices of the batched slab.
    for n in range(n_batch):
        lo, hi = n * t_len, (n + 1) * t_len
        fs_n = fs[:, lo:hi]                   # (F, T)
        ft_n = ft[:, lo:hi]                   # (F, T)

        # scores[c, d] = sum_t fs_n[c, t] * ft_n[d, t] / T
        # (contracted T is the minormost dim of BOTH MXU operands, same pattern
        #  as flash-attention's q.k^T — no explicit transpose materialized).
        scores = lax.dot_general(
            fs_n, ft_n,
            dimension_numbers=(((1,), (1,)), ((), ())),
            preferred_element_type=jnp.float32) * inv_t          # (F, F)

        # Exact softmax over d.
        scores = scores - jnp.max(scores, axis=-1, keepdims=True)
        e = jnp.exp(scores)
        attn = e / jnp.sum(e, axis=-1, keepdims=True)

        # feature_cross[c, t] = sum_d attn[c, d] * ft_n[d, t]
        cross_ref[:, lo:hi] = jnp.dot(attn, ft_n,
                                      preferred_element_type=jnp.float32)

    # Residual + feed-forward, batched over all N at once in (F, N*T):
    #   h1 = GELU(W1 @ cross + b1); h2 = W2 @ h1 + b2
    cross = cross_ref[...] + ft                                   # (F, N*T)
    h1 = _gelu_exact(jnp.dot(w1, cross, preferred_element_type=jnp.float32) + b1)
    # TODO(synk): Dropout(0.3) is identity here (inference / eval semantics).
    h2 = jnp.dot(w2, h1, preferred_element_type=jnp.float32) + b2  # (F, N*T)

    out_ref[...] = ((h2 + ft) * msk).astype(out_ref.dtype)


def sfi_forward(feature_s, feature_t, mask, params):
    """feature_s: (N,T,C), feature_t: (N,F,T), mask: (N,1,T) -> (N,F,T).

    params (PyTorch layouts): wc (F,C), bc (F,), w1 (F,F) [out,in], b1 (F,),
    w2 (F,F) [out,in], b2 (F,).
    """
    N, T, C = feature_s.shape
    _, F, _ = feature_t.shape
    wc, bc, w1, b1, w2, b2 = params
    NT = N * T

    # The PyTorch forward's feature_s.permute(0, 2, 1), plus concatenation of
    # all batch elements along T — done once in XLA so the kernel is
    # transpose-free and fully batched in (F, N*T) layout.
    xs_all = jnp.transpose(feature_s, (2, 0, 1)).reshape(C, NT)       # (C, N*T)
    ft_all = jnp.transpose(feature_t, (1, 0, 2)).reshape(F, NT)       # (F, N*T)
    mk_all = jnp.transpose(mask, (1, 0, 2)).reshape(1, NT)            # (1, N*T)

    # Packed inputs: 5 DMAs total instead of 9.
    packed = jnp.concatenate(
        [xs_all, jnp.ones((1, NT), jnp.float32), mk_all], axis=0)     # (C+2, N*T)
    wc_aug = jnp.concatenate([wc, bc.reshape(F, 1)], axis=1)          # (F, C+1)
    w_pack = jnp.concatenate([w1, w2], axis=0)                        # (2F, F)
    b_pack = jnp.stack([b1, b2], axis=1)                              # (F, 2)

    # Advisory cost estimate (tiny, latency-bound kernel inside a larger model).
    flops = int(2 * F * (C + 1) * NT            # conv
                + N * (2 * F * F * T) * 2       # scores + cross
                + 2 * (2 * F * F * NT))         # two FF matmuls
    transcendentals = int(N * F * F + F * NT)   # exp (softmax) + erf (GELU)
    bytes_accessed = int(4 * (packed.size + ft_all.size + wc_aug.size
                              + w_pack.size + b_pack.size + F * NT))

    vmem = pl.BlockSpec(memory_space=pltpu.MemorySpace.VMEM)
    out_flat = pl.pallas_call(
        functools.partial(sfi_kernel, n_batch=N, t_len=T),
        out_shape=jax.ShapeDtypeStruct((F, NT), jnp.float32),
        in_specs=[vmem] * 5,
        out_specs=vmem,
        scratch_shapes=[pltpu.VMEM((F, NT), jnp.float32)],
        cost_estimate=pl.CostEstimate(
            flops=flops,
            transcendentals=transcendentals,
            bytes_accessed=bytes_accessed),
    )(packed, ft_all, wc_aug, w_pack, b_pack)

    # (F, N*T) -> (N, F, T)
    return jnp.transpose(out_flat.reshape(F, N, T), (1, 0, 2))


def sfi_reference(feature_s, feature_t, mask, params):
    """Pure-JAX reference matching the PyTorch forward (eval mode)."""
    wc, bc, w1, b1, w2, b2 = params
    N, T, C = feature_s.shape
    # conv_s on permuted input: (N, C, T) -> (N, F, T)
    fs = jnp.einsum('ntc,fc->nft', feature_s, wc) + bc[None, :, None]
    scores = jnp.einsum('nct,ndt->ncd', fs, feature_t) / T
    amap = jax.nn.softmax(scores, axis=-1)
    cross = jnp.einsum('ncd,ndt->nct', amap, feature_t) + feature_t
    h = jnp.transpose(cross, (0, 2, 1))                    # (N, T, F)
    h1 = _gelu_exact(h @ w1.T + b1)
    h2 = h1 @ w2.T + b2
    out = jnp.transpose(h2, (0, 2, 1)) + feature_t
    return out * mask


if __name__ == "__main__":
    N, T, C_in, F = 2, 16, 4, 32

    key = jax.random.PRNGKey(0)
    ks = jax.random.split(key, 10)

    # Deterministic parameter init (PyTorch-style uniform fan-in bounds).
    def uinit(k, shape, fan_in):
        bound = 1.0 / math.sqrt(fan_in)
        return jax.random.uniform(k, shape, jnp.float32, -bound, bound)

    wc = uinit(ks[0], (F, C_in), C_in)      # Conv1d weight (F, C, 1) squeezed
    bc = uinit(ks[1], (F,), C_in)
    w1 = uinit(ks[2], (F, F), F)            # Linear weight (out, in)
    b1 = uinit(ks[3], (F,), F)
    w2 = uinit(ks[4], (F, F), F)
    b2 = uinit(ks[5], (F,), F)
    params = (wc, bc, w1, b1, w2, b2)

    feature_s = jax.random.normal(ks[6], (N, T, C_in), jnp.float32)
    feature_t = jax.random.normal(ks[7], (N, F, T), jnp.float32)
    mask = (jax.random.uniform(ks[8], (N, 1, T)) > 0.2).astype(jnp.float32)

    out = jax.block_until_ready(sfi_forward(feature_s, feature_t, mask, params))

    ref = sfi_reference(feature_s, feature_t, mask, params)
    assert out.shape == (N, F, T)
    assert jnp.allclose(out, ref, atol=1e-4, rtol=1e-4), "mismatch vs reference"

    print("KERNEL_OK")
</pallas_src>

<mosaic_0001>
module attributes {stable_mosaic.version = 11 : i64} {
  func.func @sfi_kernel(%arg0: memref<6x32xf32, #tpu.memory_space<vmem>>, %arg1: memref<32x32xf32, #tpu.memory_space<vmem>>, %arg2: memref<32x5xf32, #tpu.memory_space<vmem>>, %arg3: memref<64x32xf32, #tpu.memory_space<vmem>>, %arg4: memref<32x2xf32, #tpu.memory_space<vmem>>, %arg5: memref<32x32xf32, #tpu.memory_space<vmem>>, %arg6: memref<32x32xf32, #tpu.memory_space<vmem>>) attributes {dimension_semantics = [], scalar_prefetch = 0 : i64, scratch_operands = 1 : i64, tpu.core_type = #tpu.core_type<tc>} {
    %c0 = arith.constant 0 : index
    %c0_0 = arith.constant 0 : index
    %0 = vector.load %arg0[%c0, %c0_0] : memref<6x32xf32, #tpu.memory_space<vmem>>, vector<5x32xf32>
    %c5 = arith.constant 5 : index
    %c0_1 = arith.constant 0 : index
    %1 = vector.load %arg0[%c5, %c0_1] : memref<6x32xf32, #tpu.memory_space<vmem>>, vector<1x32xf32>
    %c0_2 = arith.constant 0 : index
    %c0_3 = arith.constant 0 : index
    %2 = vector.load %arg1[%c0_2, %c0_3] : memref<32x32xf32, #tpu.memory_space<vmem>>, vector<32x32xf32>
    %c0_4 = arith.constant 0 : index
    %c0_5 = arith.constant 0 : index
    %3 = vector.load %arg2[%c0_4, %c0_5] : memref<32x5xf32, #tpu.memory_space<vmem>>, vector<32x5xf32>
    %c0_6 = arith.constant 0 : index
    %c0_7 = arith.constant 0 : index
    %4 = vector.load %arg3[%c0_6, %c0_7] : memref<64x32xf32, #tpu.memory_space<vmem>>, vector<32x32xf32>
    %c32 = arith.constant 32 : index
    %c0_8 = arith.constant 0 : index
    %5 = vector.load %arg3[%c32, %c0_8] : memref<64x32xf32, #tpu.memory_space<vmem>>, vector<32x32xf32>
    %c0_9 = arith.constant 0 : index
    %c0_10 = arith.constant 0 : index
    %6 = vector.load %arg4[%c0_9, %c0_10] : memref<32x2xf32, #tpu.memory_space<vmem>>, vector<32x1xf32>
    %c0_11 = arith.constant 0 : index
    %c1 = arith.constant 1 : index
    %7 = vector.load %arg4[%c0_11, %c1] : memref<32x2xf32, #tpu.memory_space<vmem>>, vector<32x1xf32>
    %cst = arith.constant dense<0.000000e+00> : vector<32x32xf32>
    %8 = tpu.matmul %3, %0, %cst {dimension_numbers = #tpu.dot_dimension_numbers<[1], [0], [0], [1], [0, 0, 1, 1], [], []>} : vector<32x5xf32>, vector<5x32xf32>, vector<32x32xf32> -> vector<32x32xf32>
    %9 = vector.extract_strided_slice %8 {offsets = [0, 0], sizes = [32, 16], strides = [1, 1]} : vector<32x32xf32> to vector<32x16xf32>
    %10 = vector.extract_strided_slice %2 {offsets = [0, 0], sizes = [32, 16], strides = [1, 1]} : vector<32x32xf32> to vector<32x16xf32>
    %cst_12 = arith.constant dense<0.000000e+00> : vector<32x32xf32>
    %11 = tpu.matmul %9, %10, %cst_12 {dimension_numbers = #tpu.dot_dimension_numbers<[1], [1], [0], [0], [0, 0, 1, 0], [], []>} : vector<32x16xf32>, vector<32x16xf32>, vector<32x32xf32> -> vector<32x32xf32>
    %cst_13 = arith.constant 6.250000e-02 : f32
    %12 = vector.broadcast %cst_13 : f32 to vector<32x32xf32>
    %13 = arith.mulf %11, %12 : vector<32x32xf32>
    %cst_14 = arith.constant dense<0xFF800000> : vector<32xf32>
    %14 = vector.multi_reduction <maximumf>, %13, %cst_14 [1] : vector<32x32xf32> to vector<32xf32>
    %15 = vector.shape_cast %14 : vector<32xf32> to vector<32x1xf32>
    %16 = vector.broadcast %15 : vector<32x1xf32> to vector<32x32xf32>
    %17 = arith.subf %13, %16 : vector<32x32xf32>
    %18 = math.exp %17 : vector<32x32xf32>
    %cst_15 = arith.constant dense<0.000000e+00> : vector<32xf32>
    %19 = vector.multi_reduction <add>, %18, %cst_15 [1] : vector<32x32xf32> to vector<32xf32>
    %20 = vector.shape_cast %19 : vector<32xf32> to vector<32x1xf32>
    %21 = vector.broadcast %20 : vector<32x1xf32> to vector<32x32xf32>
    %22 = arith.divf %18, %21 : vector<32x32xf32>
    %cst_16 = arith.constant dense<0.000000e+00> : vector<32x16xf32>
    %23 = tpu.matmul %22, %10, %cst_16 {dimension_numbers = #tpu.dot_dimension_numbers<[1], [0], [0], [1], [0, 0, 1, 1], [], []>} : vector<32x32xf32>, vector<32x16xf32>, vector<32x16xf32> -> vector<32x16xf32>
    %c0_17 = arith.constant 0 : index
    %c0_18 = arith.constant 0 : index
    %24 = vector.load %arg6[%c0_17, %c0_18] : memref<32x32xf32, #tpu.memory_space<vmem>>, vector<32x16xf32>
    tpu.vector_store %arg6[%c0_17, %c0_18], %23 {strides = array<i32>} : memref<32x32xf32, #tpu.memory_space<vmem>>, vector<32x16xf32>,
    %25 = vector.extract_strided_slice %8 {offsets = [0, 16], sizes = [32, 16], strides = [1, 1]} : vector<32x32xf32> to vector<32x16xf32>
    %26 = vector.extract_strided_slice %2 {offsets = [0, 16], sizes = [32, 16], strides = [1, 1]} : vector<32x32xf32> to vector<32x16xf32>
    %cst_19 = arith.constant dense<0.000000e+00> : vector<32x32xf32>
    %27 = tpu.matmul %25, %26, %cst_19 {dimension_numbers = #tpu.dot_dimension_numbers<[1], [1], [0], [0], [0, 0, 1, 0], [], []>} : vector<32x16xf32>, vector<32x16xf32>, vector<32x32xf32> -> vector<32x32xf32>
    %cst_20 = arith.constant 6.250000e-02 : f32
    %28 = vector.broadcast %cst_20 : f32 to vector<32x32xf32>
    %29 = arith.mulf %27, %28 : vector<32x32xf32>
    %cst_21 = arith.constant dense<0xFF800000> : vector<32xf32>
    %30 = vector.multi_reduction <maximumf>, %29, %cst_21 [1] : vector<32x32xf32> to vector<32xf32>
    %31 = vector.shape_cast %30 : vector<32xf32> to vector<32x1xf32>
    %32 = vector.broadcast %31 : vector<32x1xf32> to vector<32x32xf32>
    %33 = arith.subf %29, %32 : vector<32x32xf32>
    %34 = math.exp %33 : vector<32x32xf32>
    %cst_22 = arith.constant dense<0.000000e+00> : vector<32xf32>
    %35 = vector.multi_reduction <add>, %34, %cst_22 [1] : vector<32x32xf32> to vector<32xf32>
    %36 = vector.shape_cast %35 : vector<32xf32> to vector<32x1xf32>
    %37 = vector.broadcast %36 : vector<32x1xf32> to vector<32x32xf32>
    %38 = arith.divf %34, %37 : vector<32x32xf32>
    %cst_23 = arith.constant dense<0.000000e+00> : vector<32x16xf32>
    %39 = tpu.matmul %38, %26, %cst_23 {dimension_numbers = #tpu.dot_dimension_numbers<[1], [0], [0], [1], [0, 0, 1, 1], [], []>} : vector<32x32xf32>, vector<32x16xf32>, vector<32x16xf32> -> vector<32x16xf32>
    %c0_24 = arith.constant 0 : index
    %c16 = arith.constant 16 : index
    %40 = vector.load %arg6[%c0_24, %c16] : memref<32x32xf32, #tpu.memory_space<vmem>>, vector<32x16xf32>
    tpu.vector_store %arg6[%c0_24, %c16], %39 {strides = array<i32>} : memref<32x32xf32, #tpu.memory_space<vmem>>, vector<32x16xf32>,
    %c0_25 = arith.constant 0 : index
    %c0_26 = arith.constant 0 : index
    %41 = vector.load %arg6[%c0_25, %c0_26] : memref<32x32xf32, #tpu.memory_space<vmem>>, vector<32x32xf32>
    %42 = arith.addf %41, %2 : vector<32x32xf32>
    %cst_27 = arith.constant dense<0.000000e+00> : vector<32x32xf32>
    %43 = tpu.matmul %4, %42, %cst_27 {dimension_numbers = #tpu.dot_dimension_numbers<[1], [0], [0], [1], [0, 0, 1, 1], [], []>} : vector<32x32xf32>, vector<32x32xf32>, vector<32x32xf32> -> vector<32x32xf32>
    %44 = vector.broadcast %6 : vector<32x1xf32> to vector<32x32xf32>
    %45 = arith.addf %43, %44 : vector<32x32xf32>
    %cst_28 = arith.constant 5.000000e-01 : f32
    %46 = vector.broadcast %cst_28 : f32 to vector<32x32xf32>
    %47 = arith.mulf %46, %45 : vector<32x32xf32>
    %cst_29 = arith.constant 0.707106769 : f32
    %48 = vector.broadcast %cst_29 : f32 to vector<32x32xf32>
    %49 = arith.mulf %45, %48 : vector<32x32xf32>
    %50 = math.erf %49 : vector<32x32xf32>
    %cst_30 = arith.constant 1.000000e+00 : f32
    %51 = vector.broadcast %cst_30 : f32 to vector<32x32xf32>
    %52 = arith.addf %51, %50 : vector<32x32xf32>
    %53 = arith.mulf %47, %52 : vector<32x32xf32>
    %cst_31 = arith.constant dense<0.000000e+00> : vector<32x32xf32>
    %54 = tpu.matmul %5, %53, %cst_31 {dimension_numbers = #tpu.dot_dimension_numbers<[1], [0], [0], [1], [0, 0, 1, 1], [], []>} : vector<32x32xf32>, vector<32x32xf32>, vector<32x32xf32> -> vector<32x32xf32>
    %55 = vector.broadcast %7 : vector<32x1xf32> to vector<32x32xf32>
    %56 = arith.addf %54, %55 : vector<32x32xf32>
    %57 = arith.addf %56, %2 : vector<32x32xf32>
    %58 = vector.broadcast %1 : vector<1x32xf32> to vector<32x32xf32>
    %59 = arith.mulf %57, %58 : vector<32x32xf32>
    %c0_32 = arith.constant 0 : index
    %c0_33 = arith.constant 0 : index
    %60 = vector.load %arg5[%c0_32, %c0_33] : memref<32x32xf32, #tpu.memory_space<vmem>>, vector<32x32xf32>
    tpu.vector_store %arg5[%c0_32, %c0_33], %59 {strides = array<i32>} : memref<32x32xf32, #tpu.memory_space<vmem>>, vector<32x32xf32>,
    return
  }
}

</mosaic_0001>

<llo_original>
// kernel: tpu_custom_call.1
$region0: #{tpu_custom_call.1}
  #allocation0 [shape = 'u32[]', space=smem, size = 0x4, offset = 0x4, fixed_abs, tag = 'smem constant byte address 0x4 - core index']
  #allocation1 [shape = 'u32[144,128]{1,0:T(1,128)}', space=vmem, size = 0x12000, scoped, tag = 'internal scratch']
  #allocation2 [shape = 'f32[32,32]{1,0:T(8,128)}', space=vmem, size = 0x4000, scoped, tag = 'scratch operand']
  %s0 = inlined_call_operand.vmem [shape: f32[6,32], index: 0, kind: input, shape index: {}]
  %s1 = inlined_call_operand.vmem [shape: f32[32,32], index: 1, kind: input, shape index: {}]
  %s2 = inlined_call_operand.vmem [shape: f32[32,5], index: 2, kind: input, shape index: {}]
  %s3 = inlined_call_operand.vmem [shape: f32[64,32], index: 3, kind: input, shape index: {}]
  %s4 = inlined_call_operand.vmem [shape: f32[32,2], index: 4, kind: input, shape index: {}]
  %s5 = inlined_call_operand.hbm [shape: f32[32,32], index: 5, kind: output, shape index: {}]
  %s6 = sld [smem:[#allocation0]]
  $region30: #{tpu_custom_call.1} parent=0
    _
  %s8 = ssub.s32 1, %s6
  %s9 = scalar_select 0, %s8, %s6
  $region1: #{tpu_custom_call.1} parent=0
    #allocation3 [shape = 'u8[16384]{0}', space=vmem, size = 0x4000, scoped, tag = 'output window, operand 0, single buffered']
    #allocation4 [shape = 's32[1]{0}', space=sflag, size = 0x4, scoped, tag = 'scoped memory for tpu_custom_call.1']
    %10 = vsyncpa [#allocation4], 0
    // Predicated region
    $region2: #{tpu_custom_call.1} parent=1 // pred_check
      _
    $region3: #{tpu_custom_call.1} parent=1 // pred_check_branch
      %12 = sbr.rel (0) target = $region5
    $region4: #{tpu_custom_call.1} parent=1 // pred_region
      _
    $region5: #{tpu_custom_call.1} parent=1 // pred_fallthru
      _
    // Predicated region
    $region6: #{tpu_custom_call.1} parent=1 // pred_check
      _
    $region7: #{tpu_custom_call.1} parent=1 // pred_check_branch
      %14 = sbr.rel (0) target = $region9
    $region8: #{tpu_custom_call.1} parent=1 // pred_region
      _
    $region9: #{tpu_custom_call.1} parent=1 // pred_fallthru
      _
    // Predicated region
    $region10: #{tpu_custom_call.1} parent=1 // pred_check
      _
    $region11: #{tpu_custom_call.1} parent=1 // pred_check_branch
      %16 = sbr.rel (0) target = $region13
    $region12: #{tpu_custom_call.1} parent=1 // pred_region
      _
    $region13: #{tpu_custom_call.1} parent=1 // pred_fallthru
      _
    // Predicated region
    $region14: #{tpu_custom_call.1} parent=1 // pred_check
      _
    $region15: #{tpu_custom_call.1} parent=1 // pred_check_branch
      %18 = sbr.rel (0) target = $region17
    $region16: #{tpu_custom_call.1} parent=1 // pred_region
      _
    $region17: #{tpu_custom_call.1} parent=1 // pred_fallthru
      _
    // Predicated region
    $region18: #{tpu_custom_call.1} parent=1 // pred_check
      _
    $region19: #{tpu_custom_call.1} parent=1 // pred_check_branch
      %20 = sbr.rel (0) target = $region21
    $region20: #{tpu_custom_call.1} parent=1 // pred_region
      _
    $region21: #{tpu_custom_call.1} parent=1 // pred_fallthru
      _
    %v21 = vld [vmem:[%s0] sm:$0x1f]
    %v22 = vld [vmem:[%s0 + $0x5] sm:$0x1]
    %v23 = vld [vmem:[%s1] sm:$0xff]
    %v24 = vld [vmem:[%s1 + $0x8] sm:$0xff]
    %v25 = vld [vmem:[%s1 + $0x10] sm:$0xff]
    %v26 = vld [vmem:[%s1 + $0x18] sm:$0xff]
    %v27 = vld [vmem:[%s2] sm:$0xff]
    %v28 = vld [vmem:[%s2 + $0x8] sm:$0xff]
    %v29 = vld [vmem:[%s2 + $0x10] sm:$0xff]
    %v30 = vld [vmem:[%s2 + $0x18] sm:$0xff]
    %v31 = vld [vmem:[%s3] sm:$0xff]
    %v32 = vld [vmem:[%s3 + $0x8] sm:$0xff]
    %v33 = vld [vmem:[%s3 + $0x10] sm:$0xff]
    %v34 = vld [vmem:[%s3 + $0x18] sm:$0xff]
    %v35 = vld [vmem:[%s3 + $0x20] sm:$0xff]
    %v36 = vld [vmem:[%s3 + $0x28] sm:$0xff]
    %v37 = vld [vmem:[%s3 + $0x30] sm:$0xff]
    %v38 = vld [vmem:[%s3 + $0x38] sm:$0xff]
    %v39 = vld [vmem:[%s4] sm:$0xff]
    %v40 = vld [vmem:[%s4 + $0x8] sm:$0xff]
    %v41 = vld [vmem:[%s4 + $0x10] sm:$0xff]
    %v42 = vld [vmem:[%s4 + $0x18] sm:$0xff]
    %vm43 = vcmask 39936
    %v45 = vsel %vm43, %v27, 0
    %v48 = vsel %vm43, %v28, 0
    %v51 = vsel %vm43, %v29, 0
    %v54 = vsel %vm43, %v30, 0
    %vm56 = vcmask 1044480
    %v58 = vsel %vm56, %v21, 0
    %60 = vmatprep.subr.mxu0 0.0
    %61 = vmatpush1.msra.mxu0 0.0
    %62 = vmatprep.subr.mxu0 0.0
    %63 = vmatpush1.msra.mxu0 0.0
    %64 = vmatprep.subr.mxu0 0.0
    %65 = vmatpush1.msra.mxu0 0.0
    %66 = vmatprep.subr.mxu0 0.0
    %67 = vmatpush1.msra.mxu0 0.0
    %68 = vmatprep.subr.mxu0 0.0
    %69 = vmatpush1.msra.mxu0 0.0
    %70 = vmatprep.subr.mxu0 0.0
    %71 = vmatpush1.msra.mxu0 0.0
    %72 = vmatprep.subr.mxu0 0.0
    %73 = vmatpush1.msra.mxu0 0.0
    %74 = vmatprep.subr.mxu0 0.0
    %75 = vmatpush1.msra.mxu0 0.0
    %76 = vmatprep.subr.mxu0 0.0
    %77 = vmatpush1.msra.mxu0 0.0
    %78 = vmatprep.subr.mxu0 0.0
    %79 = vmatpush1.msra.mxu0 0.0
    %80 = vmatprep.subr.mxu0 0.0
    %81 = vmatpush1.msra.mxu0 0.0
    %82 = vmatprep.subr.mxu0 0.0
    %83 = vmatpush1.msra.mxu0 0.0
    %84 = vmatprep.subr.mxu0 0.0
    %85 = vmatpush1.msra.mxu0 0.0
    %86 = vmatprep.subr.mxu0 0.0
    %87 = vmatpush1.msra.mxu0 0.0
    %88 = vmatprep.subr.mxu0 0.0
    %89 = vmatpush1.msra.mxu0 0.0
    %90 = vmatprep.subr.mxu0 0.0
    %91 = vmatpush1.msra.mxu0 %v58
    %92 = vmatprep.subr.mxu0 0.0
    %93 = vmatpush2.msra.mxu0 0.0
    %94 = vmatprep.subr.mxu0 0.0
    %95 = vmatpush2.msra.mxu0 0.0
    %96 = vmatprep.subr.mxu0 0.0
    %97 = vmatpush2.msra.mxu0 0.0
    %98 = vmatprep.subr.mxu0 0.0
    %99 = vmatpush2.msra.mxu0 0.0
    %100 = vmatprep.subr.mxu0 0.0
    %101 = vmatpush2.msra.mxu0 0.0
    %102 = vmatprep.subr.mxu0 0.0
    %103 = vmatpush2.msra.mxu0 0.0
    %104 = vmatprep.subr.mxu0 0.0
    %105 = vmatpush2.msra.mxu0 0.0
    %106 = vmatprep.subr.mxu0 0.0
    %107 = vmatpush2.msra.mxu0 0.0
    %108 = vmatprep.subr.mxu0 0.0
    %109 = vmatpush2.msra.mxu0 0.0
    %110 = vmatprep.subr.mxu0 0.0
    %111 = vmatpush2.msra.mxu0 0.0
    %112 = vmatprep.subr.mxu0 0.0
    %113 = vmatpush2.msra.mxu0 0.0
    %114 = vmatprep.subr.mxu0 0.0
    %115 = vmatpush2.msra.mxu0 0.0
    %116 = vmatprep.subr.mxu0 0.0
    %117 = vmatpush2.msra.mxu0 0.0
    %118 = vmatprep.subr.mxu0 0.0
    %119 = vmatpush2.msra.mxu0 0.0
    %120 = vmatprep.subr.mxu0 0.0
    %121 = vmatpush2.msra.mxu0 0.0
    %122 = vmatprep.subr.mxu0 0.0
    %123 = vmatpush2.msra.mxu0 0.0
    %124 = vmatprep.mubr.f32.mxu0 0.0
    %125 = vmatmul.mubr.f32.gmra.mxu0 %v45
    %v126 = vpop.f32.mrf.mxu0
    %v127 = vadd.f32 0.0, %v126
    %v128 = vpop.f32.mrf.mxu0
    %129 = vmatprep.mubr.f32.mxu0 0.0
    %130 = vmatmul.mubr.f32.gmra.mxu0 %v48
    %v131 = vpop.f32.mrf.mxu0
    %v132 = vadd.f32 0.0, %v131
    %v133 = vpop.f32.mrf.mxu0
    %134 = vmatprep.mubr.f32.mxu0 0.0
    %135 = vmatmul.mubr.f32.gmra.mxu0 %v51
    %v136 = vpop.f32.mrf.mxu0
    %v137 = vadd.f32 0.0, %v136
    %v138 = vpop.f32.mrf.mxu0
    %139 = vmatprep.mubr.f32.mxu0 0.0
    %140 = vmatmul.mubr.f32.gmra.mxu0 %v54
    %v141 = vpop.f32.mrf.mxu0
    %v142 = vadd.f32 0.0, %v141
    %v143 = vpop.f32.mrf.mxu0
    %144 = vdwg.mxu0
    %vm145 = vcmask 130048
    %v147 = vsel %vm145, %v127, 0
    %v150 = vsel %vm145, %v132, 0
    %v153 = vsel %vm145, %v137, 0
    %v156 = vsel %vm145, %v142, 0
    %v159 = vsel %vm145, %v23, 0
    %v162 = vsel %vm145, %v24, 0
    %v165 = vsel %vm145, %v25, 0
    %v168 = vsel %vm145, %v26, 0
    %170 = vmatprep.subr.mxu0 0.0
    %171 = vmatpush1.xpose.msra.mxu0 0.0
    %172 = vmatprep.subr.mxu0 0.0
    %173 = vmatpush1.xpose.msra.mxu0 0.0
    %174 = vmatprep.subr.mxu0 0.0
    %175 = vmatpush1.xpose.msra.mxu0 0.0
    %176 = vmatprep.subr.mxu0 0.0
    %177 = vmatpush1.xpose.msra.mxu0 0.0
    %178 = vmatprep.subr.mxu0 0.0
    %179 = vmatpush1.xpose.msra.mxu0 0.0
    %180 = vmatprep.subr.mxu0 0.0
    %181 = vmatpush1.xpose.msra.mxu0 0.0
    %182 = vmatprep.subr.mxu0 0.0
    %183 = vmatpush1.xpose.msra.mxu0 0.0
    %184 = vmatprep.subr.mxu0 0.0
    %185 = vmatpush1.xpose.msra.mxu0 0.0
    %186 = vmatprep.subr.mxu0 0.0
    %187 = vmatpush1.xpose.msra.mxu0 0.0
    %188 = vmatprep.subr.mxu0 0.0
    %189 = vmatpush1.xpose.msra.mxu0 0.0
    %190 = vmatprep.subr.mxu0 0.0
    %191 = vmatpush1.xpose.msra.mxu0 0.0
    %192 = vmatprep.subr.mxu0 0.0
    %193 = vmatpush1.xpose.msra.mxu0 0.0
    %194 = vmatprep.subr.mxu0 0.0
    %195 = vmatpush1.xpose.msra.mxu0 %v168
    %196 = vmatprep.subr.mxu0 0.0
    %197 = vmatpush1.xpose.msra.mxu0 %v165
    %198 = vmatprep.subr.mxu0 0.0
    %199 = vmatpush1.xpose.msra.mxu0 %v162
    %200 = vmatprep.subr.mxu0 0.0
    %201 = vmatpush1.xpose.msra.mxu0 %v159
    %202 = vmatprep.subr.mxu0 0.0
    %203 = vmatpush2.xpose.msra.mxu0 0.0
    %204 = vmatprep.subr.mxu0 0.0
    %205 = vmatpush2.xpose.msra.mxu0 0.0
    %206 = vmatprep.subr.mxu0 0.0
    %207 = vmatpush2.xpose.msra.mxu0 0.0
    %208 = vmatprep.subr.mxu0 0.0
    %209 = vmatpush2.xpose.msra.mxu0 0.0
    %210 = vmatprep.subr.mxu0 0.0
    %211 = vmatpush2.xpose.msra.mxu0 0.0
    %212 = vmatprep.subr.mxu0 0.0
    %213 = vmatpush2.xpose.msra.mxu0 0.0
    %214 = vmatprep.subr.mxu0 0.0
    %215 = vmatpush2.xpose.msra.mxu0 0.0
    %216 = vmatprep.subr.mxu0 0.0
    %217 = vmatpush2.xpose.msra.mxu0 0.0
    %218 = vmatprep.subr.mxu0 0.0
    %219 = vmatpush2.xpose.msra.mxu0 0.0
    %220 = vmatprep.subr.mxu0 0.0
    %221 = vmatpush2.xpose.msra.mxu0 0.0
    %222 = vmatprep.subr.mxu0 0.0
    %223 = vmatpush2.xpose.msra.mxu0 0.0
    %224 = vmatprep.subr.mxu0 0.0
    %225 = vmatpush2.xpose.msra.mxu0 0.0
    %226 = vmatprep.subr.mxu0 0.0
    %227 = vmatpush2.xpose.msra.mxu0 0.0
    %228 = vmatprep.subr.mxu0 0.0
    %229 = vmatpush2.xpose.msra.mxu0 0.0
    %230 = vmatprep.subr.mxu0 0.0
    %231 = vmatpush2.xpose.msra.mxu0 0.0
    %232 = vmatprep.subr.mxu0 0.0
    %233 = vmatpush2.xpose.msra.mxu0 0.0
    %234 = vmatprep.mubr.f32.mxu0 0.0
    %235 = vmatmul.mubr.f32.gmra.mxu0 %v147
    %v236 = vpop.f32.mrf.mxu0
    %v237 = vadd.f32 0.0, %v236
    %v238 = vpop.f32.mrf.mxu0
    %239 = vmatprep.mubr.f32.mxu0 0.0
    %240 = vmatmul.mubr.f32.gmra.mxu0 %v150
    %v241 = vpop.f32.mrf.mxu0
    %v242 = vadd.f32 0.0, %v241
    %v243 = vpop.f32.mrf.mxu0
    %244 = vmatprep.mubr.f32.mxu0 0.0
    %245 = vmatmul.mubr.f32.gmra.mxu0 %v153
    %v246 = vpop.f32.mrf.mxu0
    %v247 = vadd.f32 0.0, %v246
    %v248 = vpop.f32.mrf.mxu0
    %249 = vmatprep.mubr.f32.mxu0 0.0
    %250 = vmatmul.mubr.f32.gmra.mxu0 %v156
    %v251 = vpop.f32.mrf.mxu0
    %v252 = vadd.f32 0.0, %v251
    %v253 = vpop.f32.mrf.mxu0
    %254 = vdwg.mxu0
    %v255 = vmul.f32 %v237, 0.0625
    %v256 = vmul.f32 %v242, 0.0625
    %v257 = vmul.f32 %v247, 0.0625
    %v258 = vmul.f32 %v252, 0.0625
    %vm259 = vcmask 261120
    %v260 = vsel %vm259, %v255, -inf
    %261 = vmax.xlane.f32.xlu0 %v260
    %v262 = vpop.xlane.xlu0 %261
    %v263 = vsel %vm259, %v256, -inf
    %264 = vmax.xlane.f32.xlu0 %v263
    %v265 = vpop.xlane.xlu0 %264
    %v266 = vsel %vm259, %v257, -inf
    %267 = vmax.xlane.f32.xlu0 %v266
    %v268 = vpop.xlane.xlu0 %267
    %v269 = vsel %vm259, %v258, -inf
    %270 = vmax.xlane.f32.xlu0 %v269
    %v271 = vpop.xlane.xlu0 %270
    %v272 = vsub.f32 %v255, %v262
    %v273 = vsub.f32 %v256, %v265
    %v274 = vsub.f32 %v257, %v268
    %v275 = vsub.f32 %v258, %v271
    %v276 = vmul.f32 %v272, 1.442695
    %v277 = vpow.pop %v276
    %v278 = vmul.f32 %v273, 1.442695
    %v279 = vpow.pop %v278
    %v280 = vmul.f32 %v274, 1.442695
    %v281 = vpow.pop %v280
    %v282 = vmul.f32 %v275, 1.442695
    %v283 = vpow.pop %v282
    %v284 = vsel %vm259, %v277, 0.0
    %285 = vadd.xlane.f32.xlu0 %v284
    %v286 = vpop.xlane.xlu0 %285
    %v287 = vsel %vm259, %v279, 0.0
    %288 = vadd.xlane.f32.xlu0 %v287
    %v289 = vpop.xlane.xlu0 %288
    %v290 = vsel %vm259, %v281, 0.0
    %291 = vadd.xlane.f32.xlu0 %v290
    %v292 = vpop.xlane.xlu0 %291
    %v293 = vsel %vm259, %v283, 0.0
    %294 = vadd.xlane.f32.xlu0 %v293
    %v295 = vpop.xlane.xlu0 %294
    %v296 = vrcp.pop %v286
    %v297 = vmul.f32 %v277, %v296
    %v298 = vrcp.pop %v289
    %v299 = vmul.f32 %v279, %v298
    %v300 = vrcp.pop %v292
    %v301 = vmul.f32 %v281, %v300
    %v302 = vrcp.pop %v295
    %v303 = vmul.f32 %v283, %v302
    %v305 = vsel %vm259, %v297, 0
    %v308 = vsel %vm259, %v299, 0
    %v311 = vsel %vm259, %v301, 0
    %v314 = vsel %vm259, %v303, 0
    %316 = vmatprep.subr.mxu0 0.0
    %317 = vmatpush1.msra.mxu0 0.0
    %318 = vmatprep.subr.mxu0 0.0
    %319 = vmatpush1.msra.mxu0 0.0
    %320 = vmatprep.subr.mxu0 0.0
    %321 = vmatpush1.msra.mxu0 0.0
    %322 = vmatprep.subr.mxu0 0.0
    %323 = vmatpush1.msra.mxu0 0.0
    %324 = vmatprep.subr.mxu0 0.0
    %325 = vmatpush1.msra.mxu0 0.0
    %326 = vmatprep.subr.mxu0 0.0
    %327 = vmatpush1.msra.mxu0 0.0
    %328 = vmatprep.subr.mxu0 0.0
    %329 = vmatpush1.msra.mxu0 0.0
    %330 = vmatprep.subr.mxu0 0.0
    %331 = vmatpush1.msra.mxu0 0.0
    %332 = vmatprep.subr.mxu0 0.0
    %333 = vmatpush1.msra.mxu0 0.0
    %334 = vmatprep.subr.mxu0 0.0
    %335 = vmatpush1.msra.mxu0 0.0
    %336 = vmatprep.subr.mxu0 0.0
    %337 = vmatpush1.msra.mxu0 0.0
    %338 = vmatprep.subr.mxu0 0.0
    %339 = vmatpush1.msra.mxu0 0.0
    %340 = vmatprep.subr.mxu0 0.0
    %341 = vmatpush1.msra.mxu0 %v26
    %342 = vmatprep.subr.mxu0 0.0
    %343 = vmatpush1.msra.mxu0 %v25
    %344 = vmatprep.subr.mxu0 0.0
    %345 = vmatpush1.msra.mxu0 %v24
    %346 = vmatprep.subr.mxu0 0.0
    %347 = vmatpush1.msra.mxu0 %v23
    %348 = vmatprep.subr.mxu0 0.0
    %349 = vmatpush2.msra.mxu0 0.0
    %350 = vmatprep.subr.mxu0 0.0
    %351 = vmatpush2.msra.mxu0 0.0
    %352 = vmatprep.subr.mxu0 0.0
    %353 = vmatpush2.msra.mxu0 0.0
    %354 = vmatprep.subr.mxu0 0.0
    %355 = vmatpush2.msra.mxu0 0.0
    %356 = vmatprep.subr.mxu0 0.0
    %357 = vmatpush2.msra.mxu0 0.0
    %358 = vmatprep.subr.mxu0 0.0
    %359 = vmatpush2.msra.mxu0 0.0
    %360 = vmatprep.subr.mxu0 0.0
    %361 = vmatpush2.msra.mxu0 0.0
    %362 = vmatprep.subr.mxu0 0.0
    %363 = vmatpush2.msra.mxu0 0.0
    %364 = vmatprep.subr.mxu0 0.0
    %365 = vmatpush2.msra.mxu0 0.0
    %366 = vmatprep.subr.mxu0 0.0
    %367 = vmatpush2.msra.mxu0 0.0
    %368 = vmatprep.subr.mxu0 0.0
    %369 = vmatpush2.msra.mxu0 0.0
    %370 = vmatprep.subr.mxu0 0.0
    %371 = vmatpush2.msra.mxu0 0.0
    %372 = vmatprep.subr.mxu0 0.0
    %373 = vmatpush2.msra.mxu0 0.0
    %374 = vmatprep.subr.mxu0 0.0
    %375 = vmatpush2.msra.mxu0 0.0
    %376 = vmatprep.subr.mxu0 0.0
    %377 = vmatpush2.msra.mxu0 0.0
    %378 = vmatprep.subr.mxu0 0.0
    %379 = vmatpush2.msra.mxu0 0.0
    %380 = vmatprep.mubr.f32.mxu0 0.0
    %381 = vmatmul.mubr.f32.gmra.mxu0 %v305
    %v382 = vpop.f32.mrf.mxu0
    %v383 = vadd.f32 0.0, %v382
    %v384 = vpop.f32.mrf.mxu0
    %385 = vmatprep.mubr.f32.mxu0 0.0
    %386 = vmatmul.mubr.f32.gmra.mxu0 %v308
    %v387 = vpop.f32.mrf.mxu0
    %v388 = vadd.f32 0.0, %v387
    %v389 = vpop.f32.mrf.mxu0
    %390 = vmatprep.mubr.f32.mxu0 0.0
    %391 = vmatmul.mubr.f32.gmra.mxu0 %v311
    %v392 = vpop.f32.mrf.mxu0
    %v393 = vadd.f32 0.0, %v392
    %v394 = vpop.f32.mrf.mxu0
    %395 = vmatprep.mubr.f32.mxu0 0.0
    %396 = vmatmul.mubr.f32.gmra.mxu0 %v314
    %v397 = vpop.f32.mrf.mxu0
    %v398 = vadd.f32 0.0, %v397
    %v399 = vpop.f32.mrf.mxu0
    %400 = vdwg.mxu0
    %401 = vst.msk [vmem:[#allocation2] sm:$0xff] %vm145, %v383
    %402 = vst.msk [vmem:[#allocation2 + $0x8] sm:$0xff] %vm145, %v388
    %403 = vst.msk [vmem:[#allocation2 + $0x10] sm:$0xff] %vm145, %v393
    %404 = vst.msk [vmem:[#allocation2 + $0x18] sm:$0xff] %vm145, %v398
    %405 = vrot.lane.b32.xlu0 %v127, 112
    %v406 = vpop.permute.xlu0 %405
    %407 = vrot.lane.b32.xlu0 %v132, 112
    %v408 = vpop.permute.xlu0 %407
    %409 = vrot.lane.b32.xlu0 %v137, 112
    %v410 = vpop.permute.xlu0 %409
    %411 = vrot.lane.b32.xlu0 %v142, 112
    %v412 = vpop.permute.xlu0 %411
    %413 = vrot.lane.b32.xlu0 %v23, 112
    %v414 = vpop.permute.xlu0 %413
    %415 = vrot.lane.b32.xlu0 %v24, 112
    %v416 = vpop.permute.xlu0 %415
    %417 = vrot.lane.b32.xlu0 %v25, 112
    %v418 = vpop.permute.xlu0 %417
    %419 = vrot.lane.b32.xlu0 %v26, 112
    %v420 = vpop.permute.xlu0 %419
    %v421 = vsel %vm145, %v406, 0
    %v423 = vsel %vm145, %v408, 0
    %v425 = vsel %vm145, %v410, 0
    %v427 = vsel %vm145, %v412, 0
    %v429 = vsel %vm145, %v414, 0
    %v431 = vsel %vm145, %v416, 0
    %v433 = vsel %vm145, %v418, 0
    %v435 = vsel %vm145, %v420, 0
    %437 = vmatprep.subr.mxu0 0.0
    %438 = vmatpush1.xpose.msra.mxu0 0.0
    %439 = vmatprep.subr.mxu0 0.0
    %440 = vmatpush1.xpose.msra.mxu0 0.0
    %441 = vmatprep.subr.mxu0 0.0
    %442 = vmatpush1.xpose.msra.mxu0 0.0
    %443 = vmatprep.subr.mxu0 0.0
    %444 = vmatpush1.xpose.msra.mxu0 0.0
    %445 = vmatprep.subr.mxu0 0.0
    %446 = vmatpush1.xpose.msra.mxu0 0.0
    %447 = vmatprep.subr.mxu0 0.0
    %448 = vmatpush1.xpose.msra.mxu0 0.0
    %449 = vmatprep.subr.mxu0 0.0
    %450 = vmatpush1.xpose.msra.mxu0 0.0
    %451 = vmatprep.subr.mxu0 0.0
    %452 = vmatpush1.xpose.msra.mxu0 0.0
    %453 = vmatprep.subr.mxu0 0.0
    %454 = vmatpush1.xpose.msra.mxu0 0.0
    %455 = vmatprep.subr.mxu0 0.0
    %456 = vmatpush1.xpose.msra.mxu0 0.0
    %457 = vmatprep.subr.mxu0 0.0
    %458 = vmatpush1.xpose.msra.mxu0 0.0
    %459 = vmatprep.subr.mxu0 0.0
    %460 = vmatpush1.xpose.msra.mxu0 0.0
    %461 = vmatprep.subr.mxu0 0.0
    %462 = vmatpush1.xpose.msra.mxu0 %v435
    %463 = vmatprep.subr.mxu0 0.0
    %464 = vmatpush1.xpose.msra.mxu0 %v433
    %465 = vmatprep.subr.mxu0 0.0
    %466 = vmatpush1.xpose.msra.mxu0 %v431
    %467 = vmatprep.subr.mxu0 0.0
    %468 = vmatpush1.xpose.msra.mxu0 %v429
    %469 = vmatprep.subr.mxu0 0.0
    %470 = vmatpush2.xpose.msra.mxu0 0.0
    %471 = vmatprep.subr.mxu0 0.0
    %472 = vmatpush2.xpose.msra.mxu0 0.0
    %473 = vmatprep.subr.mxu0 0.0
    %474 = vmatpush2.xpose.msra.mxu0 0.0
    %475 = vmatprep.subr.mxu0 0.0
    %476 = vmatpush2.xpose.msra.mxu0 0.0
    %477 = vmatprep.subr.mxu0 0.0
    %478 = vmatpush2.xpose.msra.mxu0 0.0
    %479 = vmatprep.subr.mxu0 0.0
    %480 = vmatpush2.xpose.msra.mxu0 0.0
    %481 = vmatprep.subr.mxu0 0.0
    %482 = vmatpush2.xpose.msra.mxu0 0.0
    %483 = vmatprep.subr.mxu0 0.0
    %484 = vmatpush2.xpose.msra.mxu0 0.0
    %485 = vmatprep.subr.mxu0 0.0
    %486 = vmatpush2.xpose.msra.mxu0 0.0
    %487 = vmatprep.subr.mxu0 0.0
    %488 = vmatpush2.xpose.msra.mxu0 0.0
    %489 = vmatprep.subr.mxu0 0.0
    %490 = vmatpush2.xpose.msra.mxu0 0.0
    %491 = vmatprep.subr.mxu0 0.0
    %492 = vmatpush2.xpose.msra.mxu0 0.0
    %493 = vmatprep.subr.mxu0 0.0
    %494 = vmatpush2.xpose.msra.mxu0 0.0
    %495 = vmatprep.subr.mxu0 0.0
    %496 = vmatpush2.xpose.msra.mxu0 0.0
    %497 = vmatprep.subr.mxu0 0.0
    %498 = vmatpush2.xpose.msra.mxu0 0.0
    %499 = vmatprep.subr.mxu0 0.0
    %500 = vmatpush2.xpose.msra.mxu0 0.0
    %501 = vmatprep.mubr.f32.mxu0 0.0
    %502 = vmatmul.mubr.f32.gmra.mxu0 %v421
    %v503 = vpop.f32.mrf.mxu0
    %v504 = vadd.f32 0.0, %v503
    %v505 = vpop.f32.mrf.mxu0
    %506 = vmatprep.mubr.f32.mxu0 0.0
    %507 = vmatmul.mubr.f32.gmra.mxu0 %v423
    %v508 = vpop.f32.mrf.mxu0
    %v509 = vadd.f32 0.0, %v508
    %v510 = vpop.f32.mrf.mxu0
    %511 = vmatprep.mubr.f32.mxu0 0.0
    %512 = vmatmul.mubr.f32.gmra.mxu0 %v425
    %v513 = vpop.f32.mrf.mxu0
    %v514 = vadd.f32 0.0, %v513
    %v515 = vpop.f32.mrf.mxu0
    %516 = vmatprep.mubr.f32.mxu0 0.0
    %517 = vmatmul.mubr.f32.gmra.mxu0 %v427
    %v518 = vpop.f32.mrf.mxu0
    %v519 = vadd.f32 0.0, %v518
    %v520 = vpop.f32.mrf.mxu0
    %521 = vdwg.mxu0
    %v522 = vmul.f32 %v504, 0.0625
    %v523 = vmul.f32 %v509, 0.0625
    %v524 = vmul.f32 %v514, 0.0625
    %v525 = vmul.f32 %v519, 0.0625
    %v526 = vsel %vm259, %v522, -inf
    %527 = vmax.xlane.f32.xlu0 %v526
    %v528 = vpop.xlane.xlu0 %527
    %v529 = vsel %vm259, %v523, -inf
    %530 = vmax.xlane.f32.xlu0 %v529
    %v531 = vpop.xlane.xlu0 %530
    %v532 = vsel %vm259, %v524, -inf
    %533 = vmax.xlane.f32.xlu0 %v532
    %v534 = vpop.xlane.xlu0 %533
    %v535 = vsel %vm259, %v525, -inf
    %536 = vmax.xlane.f32.xlu0 %v535
    %v537 = vpop.xlane.xlu0 %536
    %v538 = vsub.f32 %v522, %v528
    %v539 = vsub.f32 %v523, %v531
    %v540 = vsub.f32 %v524, %v534
    %v541 = vsub.f32 %v525, %v537
    %v542 = vmul.f32 %v538, 1.442695
    %v543 = vpow.pop %v542
    %v544 = vmul.f32 %v539, 1.442695
    %v545 = vpow.pop %v544
    %v546 = vmul.f32 %v540, 1.442695
    %v547 = vpow.pop %v546
    %v548 = vmul.f32 %v541, 1.442695
    %v549 = vpow.pop %v548
    %v550 = vsel %vm259, %v543, 0.0
    %551 = vadd.xlane.f32.xlu0 %v550
    %v552 = vpop.xlane.xlu0 %551
    %v553 = vsel %vm259, %v545, 0.0
    %554 = vadd.xlane.f32.xlu0 %v553
    %v555 = vpop.xlane.xlu0 %554
    %v556 = vsel %vm259, %v547, 0.0
    %557 = vadd.xlane.f32.xlu0 %v556
    %v558 = vpop.xlane.xlu0 %557
    %v559 = vsel %vm259, %v549, 0.0
    %560 = vadd.xlane.f32.xlu0 %v559
    %v561 = vpop.xlane.xlu0 %560
    %v562 = vrcp.pop %v552
    %v563 = vmul.f32 %v543, %v562
    %v564 = vrcp.pop %v555
    %v565 = vmul.f32 %v545, %v564
    %v566 = vrcp.pop %v558
    %v567 = vmul.f32 %v547, %v566
    %v568 = vrcp.pop %v561
    %v569 = vmul.f32 %v549, %v568
    %v575 = vsel %vm259, %v563, 0
    %v578 = vsel %vm259, %v565, 0
    %v581 = vsel %vm259, %v567, 0
    %v584 = vsel %vm259, %v569, 0
    %586 = vmatprep.subr.mxu0 0.0
    %587 = vmatpush1.msra.mxu0 0.0
    %588 = vmatprep.subr.mxu0 0.0
    %589 = vmatpush1.msra.mxu0 0.0
    %590 = vmatprep.subr.mxu0 0.0
    %591 = vmatpush1.msra.mxu0 0.0
    %592 = vmatprep.subr.mxu0 0.0
    %593 = vmatpush1.msra.mxu0 0.0
    %594 = vmatprep.subr.mxu0 0.0
    %595 = vmatpush1.msra.mxu0 0.0
    %596 = vmatprep.subr.mxu0 0.0
    %597 = vmatpush1.msra.mxu0 0.0
    %598 = vmatprep.subr.mxu0 0.0
    %599 = vmatpush1.msra.mxu0 0.0
    %600 = vmatprep.subr.mxu0 0.0
    %601 = vmatpush1.msra.mxu0 0.0
    %602 = vmatprep.subr.mxu0 0.0
    %603 = vmatpush1.msra.mxu0 0.0
    %604 = vmatprep.subr.mxu0 0.0
    %605 = vmatpush1.msra.mxu0 0.0
    %606 = vmatprep.subr.mxu0 0.0
    %607 = vmatpush1.msra.mxu0 0.0
    %608 = vmatprep.subr.mxu0 0.0
    %609 = vmatpush1.msra.mxu0 0.0
    %610 = vmatprep.subr.mxu0 0.0
    %611 = vmatpush1.msra.mxu0 %v420
    %612 = vmatprep.subr.mxu0 0.0
    %613 = vmatpush1.msra.mxu0 %v418
    %614 = vmatprep.subr.mxu0 0.0
    %615 = vmatpush1.msra.mxu0 %v416
    %616 = vmatprep.subr.mxu0 0.0
    %617 = vmatpush1.msra.mxu0 %v414
    %618 = vmatprep.subr.mxu0 0.0
    %619 = vmatpush2.msra.mxu0 0.0
    %620 = vmatprep.subr.mxu0 0.0
    %621 = vmatpush2.msra.mxu0 0.0
    %622 = vmatprep.subr.mxu0 0.0
    %623 = vmatpush2.msra.mxu0 0.0
    %624 = vmatprep.subr.mxu0 0.0
    %625 = vmatpush2.msra.mxu0 0.0
    %626 = vmatprep.subr.mxu0 0.0
    %627 = vmatpush2.msra.mxu0 0.0
    %628 = vmatprep.subr.mxu0 0.0
    %629 = vmatpush2.msra.mxu0 0.0
    %630 = vmatprep.subr.mxu0 0.0
    %631 = vmatpush2.msra.mxu0 0.0
    %632 = vmatprep.subr.mxu0 0.0
    %633 = vmatpush2.msra.mxu0 0.0
    %634 = vmatprep.subr.mxu0 0.0
    %635 = vmatpush2.msra.mxu0 0.0
    %636 = vmatprep.subr.mxu0 0.0
    %637 = vmatpush2.msra.mxu0 0.0
    %638 = vmatprep.subr.mxu0 0.0
    %639 = vmatpush2.msra.mxu0 0.0
    %640 = vmatprep.subr.mxu0 0.0
    %641 = vmatpush2.msra.mxu0 0.0
    %642 = vmatprep.subr.mxu0 0.0
    %643 = vmatpush2.msra.mxu0 0.0
    %644 = vmatprep.subr.mxu0 0.0
    %645 = vmatpush2.msra.mxu0 0.0
    %646 = vmatprep.subr.mxu0 0.0
    %647 = vmatpush2.msra.mxu0 0.0
    %648 = vmatprep.subr.mxu0 0.0
    %649 = vmatpush2.msra.mxu0 0.0
    %650 = vmatprep.mubr.f32.mxu0 0.0
    %651 = vmatmul.mubr.f32.gmra.mxu0 %v575
    %v652 = vpop.f32.mrf.mxu0
    %v653 = vadd.f32 0.0, %v652
    %v654 = vpop.f32.mrf.mxu0
    %655 = vmatprep.mubr.f32.mxu0 0.0
    %656 = vmatmul.mubr.f32.gmra.mxu0 %v578
    %v657 = vpop.f32.mrf.mxu0
    %v658 = vadd.f32 0.0, %v657
    %v659 = vpop.f32.mrf.mxu0
    %660 = vmatprep.mubr.f32.mxu0 0.0
    %661 = vmatmul.mubr.f32.gmra.mxu0 %v581
    %v662 = vpop.f32.mrf.mxu0
    %v663 = vadd.f32 0.0, %v662
    %v664 = vpop.f32.mrf.mxu0
    %665 = vmatprep.mubr.f32.mxu0 0.0
    %666 = vmatmul.mubr.f32.gmra.mxu0 %v584
    %v667 = vpop.f32.mrf.mxu0
    %v668 = vadd.f32 0.0, %v667
    %v669 = vpop.f32.mrf.mxu0
    %670 = vdwg.mxu0
    %675 = vrot.lane.b32.xlu0 %v653, 16
    %v676 = vpop.permute.xlu0 %675
    %677 = vrot.lane.b32.xlu0 %v658, 16
    %v678 = vpop.permute.xlu0 %677
    %679 = vrot.lane.b32.xlu0 %v663, 16
    %v680 = vpop.permute.xlu0 %679
    %681 = vrot.lane.b32.xlu0 %v668, 16
    %v682 = vpop.permute.xlu0 %681
    %vm687 = vcmask 261248
    %688 = vst.msk [vmem:[#allocation2] sm:$0xff] %vm687, %v676
    %689 = vst.msk [vmem:[#allocation2 + $0x8] sm:$0xff] %vm687, %v678
    %690 = vst.msk [vmem:[#allocation2 + $0x10] sm:$0xff] %vm687, %v680
    %691 = vst.msk [vmem:[#allocation2 + $0x18] sm:$0xff] %vm687, %v682
    %v692 = vld [vmem:[#allocation2] sm:$0xff]
    %v693 = vld [vmem:[#allocation2 + $0x8] sm:$0xff]
    %v694 = vld [vmem:[#allocation2 + $0x10] sm:$0xff]
    %v695 = vld [vmem:[#allocation2 + $0x18] sm:$0xff]
    %v696 = vadd.f32 %v692, %v23
    %v697 = vadd.f32 %v693, %v24
    %v698 = vadd.f32 %v694, %v25
    %v699 = vadd.f32 %v695, %v26
    %701 = vset.pattern.permute.xlu0 0
    %702 = vperm.xlu0 %701, %v39
    %v703 = vpop.permute.xlu0 %702
    %706 = vset.pattern.permute.xlu0 0
    %707 = vperm.xlu0 %706, %v40
    %v708 = vpop.permute.xlu0 %707
    %711 = vset.pattern.permute.xlu0 0
    %712 = vperm.xlu0 %711, %v41
    %v713 = vpop.permute.xlu0 %712
    %716 = vset.pattern.permute.xlu0 0
    %717 = vperm.xlu0 %716, %v42
    %v718 = vpop.permute.xlu0 %717
    %v721 = vsel %vm259, %v31, 0
    %v724 = vsel %vm259, %v32, 0
    %v727 = vsel %vm259, %v33, 0
    %v730 = vsel %vm259, %v34, 0
    %732 = vmatprep.subr.mxu0 0.0
    %733 = vmatpush1.msra.mxu0 0.0
    %734 = vmatprep.subr.mxu0 0.0
    %735 = vmatpush1.msra.mxu0 0.0
    %736 = vmatprep.subr.mxu0 0.0
    %737 = vmatpush1.msra.mxu0 0.0
    %738 = vmatprep.subr.mxu0 0.0
    %739 = vmatpush1.msra.mxu0 0.0
    %740 = vmatprep.subr.mxu0 0.0
    %741 = vmatpush1.msra.mxu0 0.0
    %742 = vmatprep.subr.mxu0 0.0
    %743 = vmatpush1.msra.mxu0 0.0
    %744 = vmatprep.subr.mxu0 0.0
    %745 = vmatpush1.msra.mxu0 0.0
    %746 = vmatprep.subr.mxu0 0.0
    %747 = vmatpush1.msra.mxu0 0.0
    %748 = vmatprep.subr.mxu0 0.0
    %749 = vmatpush1.msra.mxu0 0.0
    %750 = vmatprep.subr.mxu0 0.0
    %751 = vmatpush1.msra.mxu0 0.0
    %752 = vmatprep.subr.mxu0 0.0
    %753 = vmatpush1.msra.mxu0 0.0
    %754 = vmatprep.subr.mxu0 0.0
    %755 = vmatpush1.msra.mxu0 0.0
    %756 = vmatprep.subr.mxu0 0.0
    %757 = vmatpush1.msra.mxu0 %v699
    %758 = vmatprep.subr.mxu0 0.0
    %759 = vmatpush1.msra.mxu0 %v698
    %760 = vmatprep.subr.mxu0 0.0
    %761 = vmatpush1.msra.mxu0 %v697
    %762 = vmatprep.subr.mxu0 0.0
    %763 = vmatpush1.msra.mxu0 %v696
    %764 = vmatprep.subr.mxu0 0.0
    %765 = vmatpush2.msra.mxu0 0.0
    %766 = vmatprep.subr.mxu0 0.0
    %767 = vmatpush2.msra.mxu0 0.0
    %768 = vmatprep.subr.mxu0 0.0
    %769 = vmatpush2.msra.mxu0 0.0
    %770 = vmatprep.subr.mxu0 0.0
    %771 = vmatpush2.msra.mxu0 0.0
    %772 = vmatprep.subr.mxu0 0.0
    %773 = vmatpush2.msra.mxu0 0.0
    %774 = vmatprep.subr.mxu0 0.0
    %775 = vmatpush2.msra.mxu0 0.0
    %776 = vmatprep.subr.mxu0 0.0
    %777 = vmatpush2.msra.mxu0 0.0
    %778 = vmatprep.subr.mxu0 0.0
    %779 = vmatpush2.msra.mxu0 0.0
    %780 = vmatprep.subr.mxu0 0.0
    %781 = vmatpush2.msra.mxu0 0.0
    %782 = vmatprep.subr.mxu0 0.0
    %783 = vmatpush2.msra.mxu0 0.0
    %784 = vmatprep.subr.mxu0 0.0
    %785 = vmatpush2.msra.mxu0 0.0
    %786 = vmatprep.subr.mxu0 0.0
    %787 = vmatpush2.msra.mxu0 0.0
    %788 = vmatprep.subr.mxu0 0.0
    %789 = vmatpush2.msra.mxu0 0.0
    %790 = vmatprep.subr.mxu0 0.0
    %791 = vmatpush2.msra.mxu0 0.0
    %792 = vmatprep.subr.mxu0 0.0
    %793 = vmatpush2.msra.mxu0 0.0
    %794 = vmatprep.subr.mxu0 0.0
    %795 = vmatpush2.msra.mxu0 0.0
    %796 = vmatprep.mubr.f32.mxu0 0.0
    %797 = vmatmul.mubr.f32.gmra.mxu0 %v721
    %v798 = vpop.f32.mrf.mxu0
    %v799 = vadd.f32 %v703, %v798
    %v800 = vpop.f32.mrf.mxu0
    %801 = vmatprep.mubr.f32.mxu0 0.0
    %802 = vmatmul.mubr.f32.gmra.mxu0 %v724
    %v803 = vpop.f32.mrf.mxu0
    %v804 = vadd.f32 %v708, %v803
    %v805 = vpop.f32.mrf.mxu0
    %806 = vmatprep.mubr.f32.mxu0 0.0
    %807 = vmatmul.mubr.f32.gmra.mxu0 %v727
    %v808 = vpop.f32.mrf.mxu0
    %v809 = vadd.f32 %v713, %v808
    %v810 = vpop.f32.mrf.mxu0
    %811 = vmatprep.mubr.f32.mxu0 0.0
    %812 = vmatmul.mubr.f32.gmra.mxu0 %v730
    %v813 = vpop.f32.mrf.mxu0
    %v814 = vadd.f32 %v718, %v813
    %v815 = vpop.f32.mrf.mxu0
    %816 = vdwg.mxu0
    %v817 = vmul.f32 %v799, 0.5
    %v818 = vmul.f32 %v804, 0.5
    %v819 = vmul.f32 %v809, 0.5
    %v820 = vmul.f32 %v814, 0.5
    %v821 = vmul.f32 %v799, 0.70710677
    %v822 = vmul.f32 %v804, 0.70710677
    %v823 = vmul.f32 %v809, 0.70710677
    %v824 = vmul.f32 %v814, 0.70710677
    %v825 = verf.f32.pop %v821
    %v826 = verf.f32.pop %v822
    %v827 = verf.f32.pop %v823
    %v828 = verf.f32.pop %v824
    %v829 = vadd.f32 %v825, 1.0
    %v830 = vadd.f32 %v826, 1.0
    %v831 = vadd.f32 %v827, 1.0
    %v832 = vadd.f32 %v828, 1.0
    %v833 = vmul.f32 %v817, %v829
    %v834 = vmul.f32 %v818, %v830
    %v835 = vmul.f32 %v819, %v831
    %v836 = vmul.f32 %v820, %v832
    %837 = vset.pattern.permute.xlu0 1
    %838 = vperm.xlu0 %837, %v39
    %v839 = vpop.permute.xlu0 %838
    %841 = vset.pattern.permute.xlu0 1
    %842 = vperm.xlu0 %841, %v40
    %v843 = vpop.permute.xlu0 %842
    %845 = vset.pattern.permute.xlu0 1
    %846 = vperm.xlu0 %845, %v41
    %v847 = vpop.permute.xlu0 %846
    %849 = vset.pattern.permute.xlu0 1
    %850 = vperm.xlu0 %849, %v42
    %v851 = vpop.permute.xlu0 %850
    %v854 = vsel %vm259, %v35, 0
    %v857 = vsel %vm259, %v36, 0
    %v860 = vsel %vm259, %v37, 0
    %v863 = vsel %vm259, %v38, 0
    %865 = vmatprep.subr.mxu0 0.0
    %866 = vmatpush1.msra.mxu0 0.0
    %867 = vmatprep.subr.mxu0 0.0
    %868 = vmatpush1.msra.mxu0 0.0
    %869 = vmatprep.subr.mxu0 0.0
    %870 = vmatpush1.msra.mxu0 0.0
    %871 = vmatprep.subr.mxu0 0.0
    %872 = vmatpush1.msra.mxu0 0.0
    %873 = vmatprep.subr.mxu0 0.0
    %874 = vmatpush1.msra.mxu0 0.0
    %875 = vmatprep.subr.mxu0 0.0
    %876 = vmatpush1.msra.mxu0 0.0
    %877 = vmatprep.subr.mxu0 0.0
    %878 = vmatpush1.msra.mxu0 0.0
    %879 = vmatprep.subr.mxu0 0.0
    %880 = vmatpush1.msra.mxu0 0.0
    %881 = vmatprep.subr.mxu0 0.0
    %882 = vmatpush1.msra.mxu0 0.0
    %883 = vmatprep.subr.mxu0 0.0
    %884 = vmatpush1.msra.mxu0 0.0
    %885 = vmatprep.subr.mxu0 0.0
    %886 = vmatpush1.msra.mxu0 0.0
    %887 = vmatprep.subr.mxu0 0.0
    %888 = vmatpush1.msra.mxu0 0.0
    %889 = vmatprep.subr.mxu0 0.0
    %890 = vmatpush1.msra.mxu0 %v836
    %891 = vmatprep.subr.mxu0 0.0
    %892 = vmatpush1.msra.mxu0 %v835
    %893 = vmatprep.subr.mxu0 0.0
    %894 = vmatpush1.msra.mxu0 %v834
    %895 = vmatprep.subr.mxu0 0.0
    %896 = vmatpush1.msra.mxu0 %v833
    %897 = vmatprep.subr.mxu0 0.0
    %898 = vmatpush2.msra.mxu0 0.0
    %899 = vmatprep.subr.mxu0 0.0
    %900 = vmatpush2.msra.mxu0 0.0
    %901 = vmatprep.subr.mxu0 0.0
    %902 = vmatpush2.msra.mxu0 0.0
    %903 = vmatprep.subr.mxu0 0.0
    %904 = vmatpush2.msra.mxu0 0.0
    %905 = vmatprep.subr.mxu0 0.0
    %906 = vmatpush2.msra.mxu0 0.0
    %907 = vmatprep.subr.mxu0 0.0
    %908 = vmatpush2.msra.mxu0 0.0
    %909 = vmatprep.subr.mxu0 0.0
    %910 = vmatpush2.msra.mxu0 0.0
    %911 = vmatprep.subr.mxu0 0.0
    %912 = vmatpush2.msra.mxu0 0.0
    %913 = vmatprep.subr.mxu0 0.0
    %914 = vmatpush2.msra.mxu0 0.0
    %915 = vmatprep.subr.mxu0 0.0
    %916 = vmatpush2.msra.mxu0 0.0
    %917 = vmatprep.subr.mxu0 0.0
    %918 = vmatpush2.msra.mxu0 0.0
    %919 = vmatprep.subr.mxu0 0.0
    %920 = vmatpush2.msra.mxu0 0.0
    %921 = vmatprep.subr.mxu0 0.0
    %922 = vmatpush2.msra.mxu0 0.0
    %923 = vmatprep.subr.mxu0 0.0
    %924 = vmatpush2.msra.mxu0 0.0
    %925 = vmatprep.subr.mxu0 0.0
    %926 = vmatpush2.msra.mxu0 0.0
    %927 = vmatprep.subr.mxu0 0.0
    %928 = vmatpush2.msra.mxu0 0.0
    %929 = vmatprep.mubr.f32.mxu0 0.0
    %930 = vmatmul.mubr.f32.gmra.mxu0 %v854
    %v931 = vpop.f32.mrf.mxu0
    %v932 = vadd.f32 %v839, %v931
    %v933 = vpop.f32.mrf.mxu0
    %934 = vmatprep.mubr.f32.mxu0 0.0
    %935 = vmatmul.mubr.f32.gmra.mxu0 %v857
    %v936 = vpop.f32.mrf.mxu0
    %v937 = vadd.f32 %v843, %v936
    %v938 = vpop.f32.mrf.mxu0
    %939 = vmatprep.mubr.f32.mxu0 0.0
    %940 = vmatmul.mubr.f32.gmra.mxu0 %v860
    %v941 = vpop.f32.mrf.mxu0
    %v942 = vadd.f32 %v847, %v941
    %v943 = vpop.f32.mrf.mxu0
    %944 = vmatprep.mubr.f32.mxu0 0.0
    %945 = vmatmul.mubr.f32.gmra.mxu0 %v863
    %v946 = vpop.f32.mrf.mxu0
    %v947 = vadd.f32 %v851, %v946
    %v948 = vpop.f32.mrf.mxu0
    %949 = vdwg.mxu0
    %v950 = vadd.f32 %v932, %v23
    %v951 = vadd.f32 %v937, %v24
    %v952 = vadd.f32 %v942, %v25
    %v953 = vadd.f32 %v947, %v26
    %v954 = vlaneseq
    %v955 = vshrl.u32 %v954, 7
    %v956 = vsub.s32 0, %v955
    %v957 = vrot.slane %v22, %v956
    %v958 = vmul.f32 %v950, %v957
    %v959 = vmul.f32 %v951, %v957
    %v960 = vmul.f32 %v952, %v957
    %v961 = vmul.f32 %v953, %v957
    %962 = vst.msk [vmem:[#allocation3] sm:$0xff] %vm259, %v958
    %963 = vst.msk [vmem:[#allocation3 + $0x8] sm:$0xff] %vm259, %v959
    %964 = vst.msk [vmem:[#allocation3 + $0x10] sm:$0xff] %vm259, %v960
    %965 = vst.msk [vmem:[#allocation3 + $0x18] sm:$0xff] %vm259, %v961
    // Predicated region
    $region22: #{tpu_custom_call.1} parent=1 // pred_check
      _
    $region23: #{tpu_custom_call.1} parent=1 // pred_check_branch
      %967 = sbr.rel (0) target = $region25
    $region24: #{tpu_custom_call.1} parent=1 // pred_region
      %s969 = ssub.s32 512, 512
      %970 = vsyncadd [#allocation4], %s969
      %s971 = sshll.u32 [#allocation3], 4
      %s972 = int_to_ptr.vmem [resolvable:$true] %s971
      %977 = dma.vmem_to_hbm [thread:$0]  %s972, 512, %s5, [#allocation4], 128, 128, 8
    $region25: #{tpu_custom_call.1} parent=1 // pred_fallthru
      _
    // Predicated region
    $region26: #{tpu_custom_call.1} parent=1 // pred_check
      _
    $region27: #{tpu_custom_call.1} parent=1 // pred_check_branch
      %979 = sbr.rel (0) target = $region29
    $region28: #{tpu_custom_call.1} parent=1 // pred_region
      %980 = dma.done [#allocation4], 512
    $region29: #{tpu_custom_call.1} parent=1 // pred_fallthru
      _
    %981 = vsyncpa [#allocation4], 1

</llo_original>
